<compile_context>
chip_gen: v5e
topology: v5e:2x2
jax: 0.10.0
libtpu: 0.0.40
codegen_flags: <defaults>
</compile_context>

<pallas_src>
import jax
import jax.numpy as jnp
from jax.experimental import pallas as pl
from jax.experimental.pallas import tpu as pltpu

_LANE = 128
_TARGET_TILE_BYTES = 2 * 1024 * 1024  # ~2 MiB / operand tile: safe on v5e/v6e/v7x


def _make_pe(max_len: int, d_model: int) -> jnp.ndarray:
    """Positional-encoding table matching the PyTorch double loop:
      pe[i, j] = sin(i / 10000**(j/d))      if j even
      pe[i, j] = cos(i / 10000**((j-1)/d))  if j odd
    """
    i = jnp.arange(max_len, dtype=jnp.float32)[:, None]      # (max_len, 1)
    j = jnp.arange(d_model, dtype=jnp.float32)[None, :]      # (1, d_model)
    j_even = jnp.floor(j / 2.0) * 2.0                        # j if even else j-1
    denom = jnp.power(10000.0, j_even / float(d_model))
    ang = i / denom
    is_even = (jnp.arange(d_model) % 2 == 0)[None, :]
    return jnp.where(is_even, jnp.sin(ang), jnp.cos(ang)).astype(jnp.float32)


def _add_kernel(x_ref, pe_ref, o_ref):
    # x_ref/o_ref: (tb, tr, 128); pe_ref: (tr, 128).
    # Broadcast over the leading batch sub-tile is vreg reuse only (no lane /
    # sublane movement); the body is a plain VPU add -> purely HBM-DMA bound.
    o_ref[...] = (x_ref[...] + pe_ref[...]).astype(o_ref.dtype)


def _sublane_multiple(dtype) -> int:
    # Packed sublanes: f32 -> 8, bf16 -> 16, int8/fp8 -> 32.
    return max(8, 32 // jnp.dtype(dtype).itemsize)


def _choose_tiles(batch: int, rows_per_seq: int, dtype):
    """Pick (tb, tr): tb batches x tr rows per tile, ~2 MiB per operand tile.

    Never collapses to a single whole-array block; uneven trailing blocks are
    allowed (cdiv grid + masked partial writes), so no divisor search needed.
    """
    itemsize = jnp.dtype(dtype).itemsize
    sub = _sublane_multiple(dtype)
    target_rows = max(sub, _TARGET_TILE_BYTES // (_LANE * itemsize))
    if rows_per_seq > target_rows:
        # Large sequences: tile rows within a sequence; tr multiple of the
        # dtype sublane packing (last partial block handled by the cdiv grid).
        tr = (target_rows // sub) * sub
        tb = 1
    else:
        # Small sequences: whole sequence per tile (tr == full dim, so the
        # (8,128) rule is satisfied regardless of divisibility); group batches.
        tr = rows_per_seq
        tb = max(1, min(batch, target_rows // max(rows_per_seq, 1)))
    return tb, tr


def positional_encoding(x: jnp.ndarray, pe: jnp.ndarray) -> jnp.ndarray:
    """x: (B, S, D); pe: (max_len, D). Returns x + pe[:S, :] (eval-mode dropout)."""
    B, S, D = x.shape
    dtype = x.dtype
    pe_s = pe[:S, :].astype(dtype)           # static slice + dtype match (JAX glue)

    flat = S * D
    rows_per_seq = pl.cdiv(flat, _LANE)
    padded = rows_per_seq * _LANE

    if padded == flat:
        # Common case: free, contiguous reshape to a lane-dense view.
        x3 = x.reshape(B, rows_per_seq, _LANE)
        pe2 = pe_s.reshape(rows_per_seq, _LANE)
    else:
        # Rare fallback (S*D % 128 != 0): pad the flattened per-sequence slab
        # up to 128 lanes so every store is a full, unmasked vst.  Costs one
        # extra pad copy in XLA, far cheaper than masked lane-sparse stores.
        x3 = jnp.pad(x.reshape(B, flat), ((0, 0), (0, padded - flat))).reshape(
            B, rows_per_seq, _LANE)
        pe2 = jnp.pad(pe_s.reshape(flat), (0, padded - flat)).reshape(
            rows_per_seq, _LANE)

    tb, tr = _choose_tiles(B, rows_per_seq, dtype)
    n_pe_blocks = pl.cdiv(rows_per_seq, tr)   # outer (slow) axis
    n_b_blocks = pl.cdiv(B, tb)               # inner (fast) axis

    out3 = pl.pallas_call(
        _add_kernel,
        out_shape=jax.ShapeDtypeStruct((B, rows_per_seq, _LANE), dtype),
        grid_spec=pltpu.PrefetchScalarGridSpec(
            num_scalar_prefetch=0,
            grid=(n_pe_blocks, n_b_blocks),
            in_specs=[
                # x: block index varies every step.
                pl.BlockSpec((tb, tr, _LANE), lambda p, b: (b, p, 0)),
                # pe: block index constant along the fast batch axis -> each
                # pe block is DMA'd once and stays resident for the batch sweep.
                pl.BlockSpec((tr, _LANE), lambda p, b: (p, 0)),
            ],
            out_specs=pl.BlockSpec((tb, tr, _LANE), lambda p, b: (b, p, 0)),
        ),
        compiler_params=pltpu.CompilerParams(
            dimension_semantics=("parallel", "parallel"),  # disjoint out blocks
            vmem_limit_bytes=32 * 1024 * 1024,  # raise v5e's 16 MiB default;
                                                # ~12 MiB actually used -> OK on v7x
        ),
    )(x3, pe2)

    if padded == flat:
        return out3.reshape(B, S, D)
    return out3.reshape(B, padded)[:, :flat].reshape(B, S, D)


def _check(x, pe, atol=1e-5, rtol=1e-5):
    out = jax.block_until_ready(positional_encoding(x, pe))
    ref = x.astype(jnp.float32) + pe[: x.shape[1], :][None, :, :]
    assert out.shape == x.shape
    assert out.dtype == x.dtype
    assert jnp.allclose(out.astype(jnp.float32), ref, atol=atol, rtol=rtol)


if __name__ == "__main__":
    key = jax.random.PRNGKey(0)
    k1, k2, k3, k4 = jax.random.split(key, 4)

    # 1) Small shapes consistent with the module (batch=2, seq=8, d_model=32):
    #    rows_per_seq = 2 -> whole-sequence tiles, batches grouped, pe resident.
    batch, seq, d_model = 2, 8, 32
    x = jax.random.normal(k1, (batch, seq, d_model), dtype=jnp.float32)
    pe = _make_pe(64, d_model)
    _check(x, pe)

    # 2) Larger shape exercising the multi-pe-block path with an uneven last
    #    block (rows_per_seq = 5000, tr = 4096 -> cdiv grid, masked tail).
    x_m = jax.random.normal(k2, (2, 1000, 640), dtype=jnp.float32)
    pe_m = _make_pe(1024, 640)
    _check(x_m, pe_m)

    # 3) Lane-sparse fallback: S*D not a multiple of 128 -> padded wrapper path.
    x_f = jax.random.normal(k3, (2, 8, 24), dtype=jnp.float32)
    pe_f = _make_pe(16, 24)
    _check(x_f, pe_f)

    # 4) bf16 path (dtype-dependent sublane multiple = 16).
    x_b = jax.random.normal(k4, (2, 128, 64), dtype=jnp.bfloat16)
    pe_b = _make_pe(256, 64)
    _check(x_b, pe_b, atol=0.05, rtol=1e-2)

    print("KERNEL_OK")
</pallas_src>

<mosaic_0001>
module attributes {stable_mosaic.version = 11 : i64} {
  func.func @_add_kernel(%arg0: i32, %arg1: i32, %arg2: memref<2x2x128xf32, #tpu.memory_space<vmem>>, %arg3: memref<2x128xf32, #tpu.memory_space<vmem>>, %arg4: memref<2x2x128xf32, #tpu.memory_space<vmem>>) attributes {dimension_semantics = [#tpu.dimension_semantics<parallel>, #tpu.dimension_semantics<parallel>], iteration_bounds = array<i64: 1, 1>, scalar_prefetch = 0 : i64, scratch_operands = 0 : i64, tpu.core_type = #tpu.core_type<tc>, window_params = [{transform_indices = @transform_0, window_bounds = array<i64: 2, 2, 128>}, {transform_indices = @transform_1, window_bounds = array<i64: 2, 128>}, {transform_indices = @transform_2, window_bounds = array<i64: 2, 2, 128>}]} {
    %c0 = arith.constant 0 : index
    %c0_0 = arith.constant 0 : index
    %c0_1 = arith.constant 0 : index
    %0 = vector.load %arg2[%c0, %c0_0, %c0_1] : memref<2x2x128xf32, #tpu.memory_space<vmem>>, vector<2x2x128xf32>
    %c0_2 = arith.constant 0 : index
    %c0_3 = arith.constant 0 : index
    %1 = vector.load %arg3[%c0_2, %c0_3] : memref<2x128xf32, #tpu.memory_space<vmem>>, vector<2x128xf32>
    %2 = vector.shape_cast %1 : vector<2x128xf32> to vector<1x2x128xf32>
    %3 = vector.broadcast %2 : vector<1x2x128xf32> to vector<2x2x128xf32>
    %4 = arith.addf %0, %3 : vector<2x2x128xf32>
    %c0_4 = arith.constant 0 : index
    %c0_5 = arith.constant 0 : index
    %c0_6 = arith.constant 0 : index
    %5 = vector.load %arg4[%c0_4, %c0_5, %c0_6] : memref<2x2x128xf32, #tpu.memory_space<vmem>>, vector<2x2x128xf32>
    tpu.vector_store %arg4[%c0_4, %c0_5, %c0_6], %4 {strides = array<i32>} : memref<2x2x128xf32, #tpu.memory_space<vmem>>, vector<2x2x128xf32>,
    return
  }
  func.func @transform_0(%arg0: i32, %arg1: i32) -> (i32, i32, i32) {
    %c0_i32 = arith.constant 0 : i32
    %c0_i32_0 = arith.constant 0 : i32
    return %arg1, %arg0, %c0_i32 : i32, i32, i32
  }
  func.func @transform_1(%arg0: i32, %arg1: i32) -> (i32, i32) {
    %c0_i32 = arith.constant 0 : i32
    %c0_i32_0 = arith.constant 0 : i32
    return %arg0, %c0_i32 : i32, i32
  }
  func.func @transform_2(%arg0: i32, %arg1: i32) -> (i32, i32, i32) {
    %c0_i32 = arith.constant 0 : i32
    %c0_i32_0 = arith.constant 0 : i32
    return %arg1, %arg0, %c0_i32 : i32, i32, i32
  }
}

</mosaic_0001>

<llo_original>
// kernel: tpu_custom_call.1
$region0: #{tpu_custom_call.1}
  #allocation0 [shape = 'u32[]', space=smem, size = 0x4, offset = 0x4, fixed_abs, tag = 'smem constant byte address 0x4 - core index']
  #allocation1 [shape = 'u32[72,128]{1,0:T(1,128)}', space=vmem, size = 0x9000, scoped, tag = 'internal scratch']
  %s0 = inlined_call_operand.hbm [shape: f32[2,2,128], index: 0, kind: input, shape index: {}]
  %s1 = inlined_call_operand.hbm [shape: f32[2,128], index: 1, kind: input, shape index: {}]
  %s2 = inlined_call_operand.hbm [shape: f32[2,2,128], index: 2, kind: output, shape index: {}]
  %s3 = sld [smem:[#allocation0]]
  $region26: #{tpu_custom_call.1} parent=0
    _
  %s5 = ssub.s32 1, %s3
  %s6 = scalar_select 0, %s5, %s3
  $region1: #{tpu_custom_call.1} parent=0
    #allocation2 [shape = 'u8[2048]{0}', space=vmem, size = 0x800, scoped, tag = 'input window, operand 0, single buffered']
    #allocation3 [shape = 's32[1]{0}', space=sflag, size = 0x4, scoped, tag = 'scoped memory for tpu_custom_call.1']
    #allocation4 [shape = 's32[1]{0}', space=sflag, size = 0x4, scoped, tag = 'scoped memory for tpu_custom_call.1']
    #allocation5 [shape = 'u8[1024]{0}', space=vmem, size = 0x400, scoped, tag = 'input window, operand 1, single buffered']
    #allocation6 [shape = 's32[1]{0}', space=sflag, size = 0x4, scoped, tag = 'scoped memory for tpu_custom_call.1']
    #allocation7 [shape = 'u8[2048]{0}', space=vmem, size = 0x800, scoped, tag = 'output window, operand 0, single buffered']
    %7 = vsyncpa [#allocation3], 0
    %8 = vsyncpa [#allocation6], 0
    %9 = vsyncpa [#allocation4], 0
    // Predicated region
    $region2: #{tpu_custom_call.1} parent=1 // pred_check
      _
    $region3: #{tpu_custom_call.1} parent=1 // pred_check_branch
      %11 = sbr.rel (0) target = $region5
    $region4: #{tpu_custom_call.1} parent=1 // pred_region
      %13 = vsyncadd [#allocation3], 0
      %s14 = sshll.u32 %s0, 4
      %s15 = int_to_ptr.hbm [resolvable:$true] %s14
      %s16 = sshll.u32 [#allocation2], 4
      %s17 = int_to_ptr.vmem [resolvable:$true] %s16
      %22 = dma.hbm_to_vmem [thread:$0]  %s15, 64, %s17, [#allocation3], 32, 32, 2
    $region5: #{tpu_custom_call.1} parent=1 // pred_fallthru
      _
    // Predicated region
    $region6: #{tpu_custom_call.1} parent=1 // pred_check
      _
    $region7: #{tpu_custom_call.1} parent=1 // pred_check_branch
      %24 = sbr.rel (0) target = $region9
    $region8: #{tpu_custom_call.1} parent=1 // pred_region
      %26 = vsyncadd [#allocation6], 0
      %s28 = sshll.u32 %s1, 4
      %s29 = int_to_ptr.hbm [resolvable:$true] %s28
      %s30 = sshll.u32 [#allocation5], 4
      %s31 = int_to_ptr.vmem [resolvable:$true] %s30
      %33 = dma.hbm_to_vmem [thread:$0]  %s29, 32, %s31, [#allocation6]
    $region9: #{tpu_custom_call.1} parent=1 // pred_fallthru
      _
    // Predicated region
    $region10: #{tpu_custom_call.1} parent=1 // pred_check
      _
    $region11: #{tpu_custom_call.1} parent=1 // pred_check_branch
      %35 = sbr.rel (0) target = $region13
    $region12: #{tpu_custom_call.1} parent=1 // pred_region
      %37 = dma.done [#allocation3], 64
    $region13: #{tpu_custom_call.1} parent=1 // pred_fallthru
      _
    // Predicated region
    $region14: #{tpu_custom_call.1} parent=1 // pred_check
      _
    $region15: #{tpu_custom_call.1} parent=1 // pred_check_branch
      %39 = sbr.rel (0) target = $region17
    $region16: #{tpu_custom_call.1} parent=1 // pred_region
      %41 = dma.done [#allocation6], 32
    $region17: #{tpu_custom_call.1} parent=1 // pred_fallthru
      _
    %v42 = vld [vmem:[#allocation2] sm:$0x3]
    %v43 = vld [vmem:[#allocation2 + $0x2] sm:$0x3]
    %v44 = vld [vmem:[#allocation5] sm:$0x3]
    %v45 = vadd.f32 %v42, %v44
    %v46 = vadd.f32 %v43, %v44
    %47 = vst [vmem:[#allocation7] sm:$0x3] %v45
    %48 = vst [vmem:[#allocation7 + $0x2] sm:$0x3] %v46
    // Predicated region
    $region18: #{tpu_custom_call.1} parent=1 // pred_check
      _
    $region19: #{tpu_custom_call.1} parent=1 // pred_check_branch
      %50 = sbr.rel (0) target = $region21
    $region20: #{tpu_custom_call.1} parent=1 // pred_region
      %52 = vsyncadd [#allocation4], 0
      %s53 = sshll.u32 [#allocation7], 4
      %s54 = int_to_ptr.vmem [resolvable:$true] %s53
      %s55 = sshll.u32 %s2, 4
      %s56 = int_to_ptr.hbm [resolvable:$true] %s55
      %61 = dma.vmem_to_hbm [thread:$0]  %s54, 64, %s56, [#allocation4], 32, 32, 2
    $region21: #{tpu_custom_call.1} parent=1 // pred_fallthru
      _
    // Predicated region
    $region22: #{tpu_custom_call.1} parent=1 // pred_check
      _
    $region23: #{tpu_custom_call.1} parent=1 // pred_check_branch
      %63 = sbr.rel (0) target = $region25
    $region24: #{tpu_custom_call.1} parent=1 // pred_region
      %65 = dma.done [#allocation4], 64
    $region25: #{tpu_custom_call.1} parent=1 // pred_fallthru
      _
    %66 = vsyncpa [#allocation3], 1
    %67 = vsyncpa [#allocation6], 1
    %68 = vsyncpa [#allocation4], 1

</llo_original>
